<compile_context>
chip_gen: v5e
topology: v5e:2x2
jax: 0.10.0
libtpu: 0.0.40
codegen_flags: <defaults>
</compile_context>

<pallas_src>
import functools

import jax
import jax.numpy as jnp
from jax.experimental import pallas as pl
from jax.experimental.pallas import tpu as pltpu


def _round_up(x: int, m: int) -> int:
    return ((x + m - 1) // m) * m


def _fused_mlp_kernel(*refs, num_layers: int, compute_dtype):
    """refs = (x_ref, w0_ref, b0_ref, ..., w{n-1}_ref, b{n-1}_ref, o_ref).

    One (tm, input_dim) row tile of x -> (tm, output_dim) row tile of output.
    Matmuls run in `compute_dtype` with f32 accumulation; bias add / ReLU in
    f32; final store is o_ref.dtype at the true (unpadded) output width.
    """
    x_ref = refs[0]
    o_ref = refs[-1]

    h = x_ref[...].astype(compute_dtype)          # in-register cast (no HBM copy)
    for li in range(num_layers):
        w_ref = refs[1 + 2 * li]
        b_ref = refs[2 + 2 * li]
        y = jnp.dot(h, w_ref[...], preferred_element_type=jnp.float32)
        y = y + b_ref[...]                        # (1, out) f32 bias broadcast
        if li < num_layers - 1:
            h = jnp.maximum(y, 0.0).astype(compute_dtype)   # ReLU, back to MXU dtype
        else:
            h = y                                 # last layer: no ReLU
    o_ref[...] = h.astype(o_ref.dtype)            # unpadded, x.dtype store


def init_mlp_params(key, input_dim, hidden_dim, output_dim, num_layers):
    """Deterministic synthetic parameters matching nn.Linear shapes.

    Weights are stored (in, out) -- transposed w.r.t. PyTorch's (out, in) --
    biases are (out,).  Uses torch's default uniform(+-1/sqrt(fan_in)) scale.
    """
    h = [hidden_dim] * (num_layers - 1)
    dims = list(zip([input_dim] + h, h + [output_dim]))
    params = []
    for (n, k) in dims:
        kw, kb, key = jax.random.split(key, 3)
        bound = 1.0 / (n ** 0.5)
        w = jax.random.uniform(kw, (n, k), jnp.float32, -bound, bound)
        b = jax.random.uniform(kb, (k,), jnp.float32, -bound, bound)
        params.append((w, b))
    return params


def prepare_params(params, compute_dtype=jnp.bfloat16):
    """One-time prep, hoisted out of the forward path: cast weights to the MXU
    compute dtype and reshape biases to (1, out) float32."""
    prepared = []
    for w, b in params:
        prepared.append((jnp.asarray(w, compute_dtype),
                         jnp.asarray(b, jnp.float32).reshape(1, -1)))
    return prepared


def mlp_forward(x, prepared_params, *, block_m: int = 2048,
                compute_dtype=jnp.bfloat16, single_buffer_weights: bool = True):
    """x: (..., input_dim) -> (..., output_dim), matching the PyTorch MLP."""
    lead_shape = x.shape[:-1]
    x2 = x.reshape(-1, x.shape[-1])
    M, C0 = x2.shape
    num_layers = len(prepared_params)
    dims = [C0] + [int(w.shape[1]) for w, _ in prepared_params]
    out_dim = dims[-1]
    out_dtype = x.dtype

    # Row tile: multiple of 16 (bf16 sublane packing), at most block_m, and
    # capped so the "parallel" grid axis has >= ~4 tiles (2 per v7x core)
    # whenever there is enough work.
    tm = min(block_m, _round_up(M, 16))
    tm = min(tm, max(16, _round_up(pl.cdiv(M, 4), 16)))
    grid_m = pl.cdiv(M, tm)          # ragged last tile handled by partial DMAs

    flat_params = []
    for w, b in prepared_params:
        flat_params += [w, b]

    # Honest traffic / flop estimates from the true (unpadded) shapes.
    param_bytes = sum(int(a.size) * a.dtype.itemsize for a in flat_params)
    x_bytes = M * C0 * x2.dtype.itemsize
    out_bytes = M * out_dim * jnp.dtype(out_dtype).itemsize
    flops = 2 * M * sum(a * b for a, b in zip(dims[:-1], dims[1:]))
    cost = pl.CostEstimate(flops=flops, transcendentals=0,
                           bytes_accessed=x_bytes + param_bytes + out_bytes)

    # VMEM budget: double-buffered x/out tiles + (worst-case double-buffered)
    # resident weights + slack for live f32 activations.  Floor at the 32 MiB
    # scoped default; cap at v7x's 64 MiB physical VMEM.
    needed = (2 * tm * C0 * x2.dtype.itemsize
              + 2 * tm * out_dim * jnp.dtype(out_dtype).itemsize
              + 2 * param_bytes
              + 4 * tm * max(dims) * 4)
    vmem_limit = int(min(64 * 2 ** 20, max(32 * 2 ** 20, 2 * needed)))

    def run(single_buffer: bool):
        wb_kwargs = dict(pipeline_mode=pl.Buffered(1)) if single_buffer else {}
        in_specs = [pl.BlockSpec((tm, C0), lambda i: (i, 0))]
        for li in range(num_layers):
            in_specs.append(pl.BlockSpec((dims[li], dims[li + 1]),
                                         lambda i: (0, 0), **wb_kwargs))
            in_specs.append(pl.BlockSpec((1, dims[li + 1]),
                                         lambda i: (0, 0), **wb_kwargs))
        out_spec = pl.BlockSpec((tm, out_dim), lambda i: (i, 0))

        return pl.pallas_call(
            functools.partial(_fused_mlp_kernel, num_layers=num_layers,
                              compute_dtype=compute_dtype),
            out_shape=jax.ShapeDtypeStruct((M, out_dim), out_dtype),
            grid_spec=pltpu.PrefetchScalarGridSpec(
                num_scalar_prefetch=0,
                grid=(grid_m,),
                in_specs=in_specs,
                out_specs=out_spec,
            ),
            compiler_params=pltpu.CompilerParams(
                dimension_semantics=("parallel",),   # shard row tiles over TCs (v7x)
                vmem_limit_bytes=vmem_limit,
            ),
            cost_estimate=cost,
        )(x2, *flat_params)

    if single_buffer_weights:
        # pl.Buffered(1) is pure VMEM savings for constant-index blocks; fall
        # back gracefully if this JAX/Mosaic build does not accept it.
        try:
            out2 = run(True)
        except Exception:
            out2 = run(False)
    else:
        out2 = run(False)

    return out2.reshape(*lead_shape, out_dim)


if __name__ == "__main__":
    # Small synthetic shapes consistent with the module: batch=2, tokens=8, input_dim=16.
    input_dim, hidden_dim, output_dim, num_layers = 16, 32, 4, 3

    key = jax.random.PRNGKey(0)
    kx, kp = jax.random.split(key)
    x = jax.random.normal(kx, (2, 8, input_dim), dtype=jnp.float32)
    params = init_mlp_params(kp, input_dim, hidden_dim, output_dim, num_layers)
    prepared = prepare_params(params)     # one-time prep; nothing padded per call

    out = mlp_forward(x, prepared)
    out = jax.block_until_ready(out)
    assert out.shape == (2, 8, output_dim)
    assert out.dtype == x.dtype

    # Reference emulating the same bf16-operand / f32-accumulate math.
    ref = x.reshape(-1, input_dim).astype(jnp.bfloat16)
    for i, (w, b) in enumerate(params):
        ref = jnp.dot(ref, w.astype(jnp.bfloat16),
                      preferred_element_type=jnp.float32) + b
        if i < num_layers - 1:
            ref = jnp.maximum(ref, 0.0).astype(jnp.bfloat16)
    ref = ref.astype(jnp.float32).reshape(2, 8, output_dim)
    assert jnp.allclose(out, ref, atol=2e-2, rtol=2e-2), "mismatch vs bf16 reference"

    # Loose sanity check against the full-f32 reference (bf16 MXU inputs differ slightly).
    ref32 = x.reshape(-1, input_dim)
    for i, (w, b) in enumerate(params):
        ref32 = ref32 @ w + b
        if i < num_layers - 1:
            ref32 = jnp.maximum(ref32, 0.0)
    ref32 = ref32.reshape(2, 8, output_dim)
    assert jnp.allclose(out, ref32, atol=1e-1, rtol=1e-1), "mismatch vs f32 reference"

    print("KERNEL_OK")
</pallas_src>

<mosaic_0001>
module attributes {stable_mosaic.version = 11 : i64} {
  func.func @_fused_mlp_kernel(%arg0: i32, %arg1: memref<16x16xf32, #tpu.memory_space<vmem>>, %arg2: memref<16x32xbf16, #tpu.memory_space<vmem>>, %arg3: memref<1x32xf32, #tpu.memory_space<vmem>>, %arg4: memref<32x32xbf16, #tpu.memory_space<vmem>>, %arg5: memref<1x32xf32, #tpu.memory_space<vmem>>, %arg6: memref<32x4xbf16, #tpu.memory_space<vmem>>, %arg7: memref<1x4xf32, #tpu.memory_space<vmem>>, %arg8: memref<16x4xf32, #tpu.memory_space<vmem>>) attributes {dimension_semantics = [#tpu.dimension_semantics<parallel>], iteration_bounds = array<i64: 1>, scalar_prefetch = 0 : i64, scratch_operands = 0 : i64, tpu.core_type = #tpu.core_type<tc>, window_params = [{transform_indices = @transform_0, window_bounds = array<i64: 16, 16>}, {pipeline_mode = #tpu.pipeline_mode<synchronous>, transform_indices = @transform_1, window_bounds = array<i64: 16, 32>}, {pipeline_mode = #tpu.pipeline_mode<synchronous>, transform_indices = @transform_2, window_bounds = array<i64: 1, 32>}, {pipeline_mode = #tpu.pipeline_mode<synchronous>, transform_indices = @transform_3, window_bounds = array<i64: 32, 32>}, {pipeline_mode = #tpu.pipeline_mode<synchronous>, transform_indices = @transform_4, window_bounds = array<i64: 1, 32>}, {pipeline_mode = #tpu.pipeline_mode<synchronous>, transform_indices = @transform_5, window_bounds = array<i64: 32, 4>}, {pipeline_mode = #tpu.pipeline_mode<synchronous>, transform_indices = @transform_6, window_bounds = array<i64: 1, 4>}, {transform_indices = @transform_7, window_bounds = array<i64: 16, 4>}]} {
    %c0 = arith.constant 0 : index
    %c0_0 = arith.constant 0 : index
    %0 = vector.load %arg1[%c0, %c0_0] : memref<16x16xf32, #tpu.memory_space<vmem>>, vector<16x16xf32>
    %1 = arith.truncf %0 : vector<16x16xf32> to vector<16x16xbf16>
    %c0_1 = arith.constant 0 : index
    %c0_2 = arith.constant 0 : index
    %2 = vector.load %arg2[%c0_1, %c0_2] : memref<16x32xbf16, #tpu.memory_space<vmem>>, vector<16x32xbf16>
    %cst = arith.constant dense<0.000000e+00> : vector<16x32xf32>
    %3 = tpu.matmul %1, %2, %cst {dimension_numbers = #tpu.dot_dimension_numbers<[1], [0], [0], [1], [0, 0, 1, 1], [], []>} : vector<16x16xbf16>, vector<16x32xbf16>, vector<16x32xf32> -> vector<16x32xf32>
    %c0_3 = arith.constant 0 : index
    %c0_4 = arith.constant 0 : index
    %4 = vector.load %arg3[%c0_3, %c0_4] : memref<1x32xf32, #tpu.memory_space<vmem>>, vector<1x32xf32>
    %5 = vector.broadcast %4 : vector<1x32xf32> to vector<16x32xf32>
    %6 = arith.addf %3, %5 : vector<16x32xf32>
    %cst_5 = arith.constant 0.000000e+00 : f32
    %7 = vector.broadcast %cst_5 : f32 to vector<16x32xf32>
    %8 = arith.maximumf %6, %7 : vector<16x32xf32>
    %9 = arith.truncf %8 : vector<16x32xf32> to vector<16x32xbf16>
    %c0_6 = arith.constant 0 : index
    %c0_7 = arith.constant 0 : index
    %10 = vector.load %arg4[%c0_6, %c0_7] : memref<32x32xbf16, #tpu.memory_space<vmem>>, vector<32x32xbf16>
    %cst_8 = arith.constant dense<0.000000e+00> : vector<16x32xf32>
    %11 = tpu.matmul %9, %10, %cst_8 {dimension_numbers = #tpu.dot_dimension_numbers<[1], [0], [0], [1], [0, 0, 1, 1], [], []>} : vector<16x32xbf16>, vector<32x32xbf16>, vector<16x32xf32> -> vector<16x32xf32>
    %c0_9 = arith.constant 0 : index
    %c0_10 = arith.constant 0 : index
    %12 = vector.load %arg5[%c0_9, %c0_10] : memref<1x32xf32, #tpu.memory_space<vmem>>, vector<1x32xf32>
    %13 = vector.broadcast %12 : vector<1x32xf32> to vector<16x32xf32>
    %14 = arith.addf %11, %13 : vector<16x32xf32>
    %cst_11 = arith.constant 0.000000e+00 : f32
    %15 = vector.broadcast %cst_11 : f32 to vector<16x32xf32>
    %16 = arith.maximumf %14, %15 : vector<16x32xf32>
    %17 = arith.truncf %16 : vector<16x32xf32> to vector<16x32xbf16>
    %c0_12 = arith.constant 0 : index
    %c0_13 = arith.constant 0 : index
    %18 = vector.load %arg6[%c0_12, %c0_13] : memref<32x4xbf16, #tpu.memory_space<vmem>>, vector<32x4xbf16>
    %cst_14 = arith.constant dense<0.000000e+00> : vector<16x4xf32>
    %19 = tpu.matmul %17, %18, %cst_14 {dimension_numbers = #tpu.dot_dimension_numbers<[1], [0], [0], [1], [0, 0, 1, 1], [], []>} : vector<16x32xbf16>, vector<32x4xbf16>, vector<16x4xf32> -> vector<16x4xf32>
    %c0_15 = arith.constant 0 : index
    %c0_16 = arith.constant 0 : index
    %20 = vector.load %arg7[%c0_15, %c0_16] : memref<1x4xf32, #tpu.memory_space<vmem>>, vector<1x4xf32>
    %21 = vector.broadcast %20 : vector<1x4xf32> to vector<16x4xf32>
    %22 = arith.addf %19, %21 : vector<16x4xf32>
    %c0_17 = arith.constant 0 : index
    %c0_18 = arith.constant 0 : index
    %23 = vector.load %arg8[%c0_17, %c0_18] : memref<16x4xf32, #tpu.memory_space<vmem>>, vector<16x4xf32>
    tpu.vector_store %arg8[%c0_17, %c0_18], %22 {strides = array<i32>} : memref<16x4xf32, #tpu.memory_space<vmem>>, vector<16x4xf32>,
    return
  }
  func.func @transform_0(%arg0: i32) -> (i32, i32) {
    %c0_i32 = arith.constant 0 : i32
    %c0_i32_0 = arith.constant 0 : i32
    return %arg0, %c0_i32 : i32, i32
  }
  func.func @transform_1(%arg0: i32) -> (i32, i32) {
    %c0_i32 = arith.constant 0 : i32
    %c0_i32_0 = arith.constant 0 : i32
    %c0_i32_1 = arith.constant 0 : i32
    return %c0_i32, %c0_i32_0 : i32, i32
  }
  func.func @transform_2(%arg0: i32) -> (i32, i32) {
    %c0_i32 = arith.constant 0 : i32
    %c0_i32_0 = arith.constant 0 : i32
    %c0_i32_1 = arith.constant 0 : i32
    return %c0_i32, %c0_i32_0 : i32, i32
  }
  func.func @transform_3(%arg0: i32) -> (i32, i32) {
    %c0_i32 = arith.constant 0 : i32
    %c0_i32_0 = arith.constant 0 : i32
    %c0_i32_1 = arith.constant 0 : i32
    return %c0_i32, %c0_i32_0 : i32, i32
  }
  func.func @transform_4(%arg0: i32) -> (i32, i32) {
    %c0_i32 = arith.constant 0 : i32
    %c0_i32_0 = arith.constant 0 : i32
    %c0_i32_1 = arith.constant 0 : i32
    return %c0_i32, %c0_i32_0 : i32, i32
  }
  func.func @transform_5(%arg0: i32) -> (i32, i32) {
    %c0_i32 = arith.constant 0 : i32
    %c0_i32_0 = arith.constant 0 : i32
    %c0_i32_1 = arith.constant 0 : i32
    return %c0_i32, %c0_i32_0 : i32, i32
  }
  func.func @transform_6(%arg0: i32) -> (i32, i32) {
    %c0_i32 = arith.constant 0 : i32
    %c0_i32_0 = arith.constant 0 : i32
    %c0_i32_1 = arith.constant 0 : i32
    return %c0_i32, %c0_i32_0 : i32, i32
  }
  func.func @transform_7(%arg0: i32) -> (i32, i32) {
    %c0_i32 = arith.constant 0 : i32
    %c0_i32_0 = arith.constant 0 : i32
    return %arg0, %c0_i32 : i32, i32
  }
}

module attributes {stable_mosaic.version = 11 : i64} {
  func.func @_fused_mlp_kernel(%arg0: i32, %arg1: memref<16x16xf32, #tpu.memory_space<vmem>>, %arg2: memref<16x32xbf16, #tpu.memory_space<vmem>>, %arg3: memref<1x32xf32, #tpu.memory_space<vmem>>, %arg4: memref<32x32xbf16, #tpu.memory_space<vmem>>, %arg5: memref<1x32xf32, #tpu.memory_space<vmem>>, %arg6: memref<32x4xbf16, #tpu.memory_space<vmem>>, %arg7: memref<1x4xf32, #tpu.memory_space<vmem>>, %arg8: memref<16x4xf32, #tpu.memory_space<vmem>>) attributes {dimension_semantics = [#tpu.dimension_semantics<parallel>], iteration_bounds = array<i64: 1>, scalar_prefetch = 0 : i64, scratch_operands = 0 : i64, tpu.core_type = #tpu.core_type<tc>, window_params = [{transform_indices = @transform_0, window_bounds = array<i64: 16, 16>}, {pipeline_mode = #tpu.pipeline_mode<synchronous>, transform_indices = @transform_1, window_bounds = array<i64: 16, 32>}, {pipeline_mode = #tpu.pipeline_mode<synchronous>, transform_indices = @transform_2, window_bounds = array<i64: 1, 32>}, {pipeline_mode = #tpu.pipeline_mode<synchronous>, transform_indices = @transform_3, window_bounds = array<i64: 32, 32>}, {pipeline_mode = #tpu.pipeline_mode<synchronous>, transform_indices = @transform_4, window_bounds = array<i64: 1, 32>}, {pipeline_mode = #tpu.pipeline_mode<synchronous>, transform_indices = @transform_5, window_bounds = array<i64: 32, 4>}, {pipeline_mode = #tpu.pipeline_mode<synchronous>, transform_indices = @transform_6, window_bounds = array<i64: 1, 4>}, {transform_indices = @transform_7, window_bounds = array<i64: 16, 4>}]} {
    %c0 = arith.constant 0 : index
    %c0_0 = arith.constant 0 : index
    %0 = vector.load %arg1[%c0, %c0_0] : memref<16x16xf32, #tpu.memory_space<vmem>>, vector<16x16xf32>
    %1 = arith.truncf %0 : vector<16x16xf32> to vector<16x16xbf16>
    %c0_1 = arith.constant 0 : index
    %c0_2 = arith.constant 0 : index
    %2 = vector.load %arg2[%c0_1, %c0_2] : memref<16x32xbf16, #tpu.memory_space<vmem>>, vector<16x32xbf16>
    %cst = arith.constant dense<0.000000e+00> : vector<16x32xf32>
    %3 = tpu.matmul %1, %2, %cst {dimension_numbers = #tpu.dot_dimension_numbers<[1], [0], [0], [1], [0, 0, 1, 1], [], []>} : vector<16x16xbf16>, vector<16x32xbf16>, vector<16x32xf32> -> vector<16x32xf32>
    %c0_3 = arith.constant 0 : index
    %c0_4 = arith.constant 0 : index
    %4 = vector.load %arg3[%c0_3, %c0_4] : memref<1x32xf32, #tpu.memory_space<vmem>>, vector<1x32xf32>
    %5 = vector.broadcast %4 : vector<1x32xf32> to vector<16x32xf32>
    %6 = arith.addf %3, %5 : vector<16x32xf32>
    %cst_5 = arith.constant 0.000000e+00 : f32
    %7 = vector.broadcast %cst_5 : f32 to vector<16x32xf32>
    %8 = arith.maximumf %6, %7 : vector<16x32xf32>
    %9 = arith.truncf %8 : vector<16x32xf32> to vector<16x32xbf16>
    %c0_6 = arith.constant 0 : index
    %c0_7 = arith.constant 0 : index
    %10 = vector.load %arg4[%c0_6, %c0_7] : memref<32x32xbf16, #tpu.memory_space<vmem>>, vector<32x32xbf16>
    %cst_8 = arith.constant dense<0.000000e+00> : vector<16x32xf32>
    %11 = tpu.matmul %9, %10, %cst_8 {dimension_numbers = #tpu.dot_dimension_numbers<[1], [0], [0], [1], [0, 0, 1, 1], [], []>} : vector<16x32xbf16>, vector<32x32xbf16>, vector<16x32xf32> -> vector<16x32xf32>
    %c0_9 = arith.constant 0 : index
    %c0_10 = arith.constant 0 : index
    %12 = vector.load %arg5[%c0_9, %c0_10] : memref<1x32xf32, #tpu.memory_space<vmem>>, vector<1x32xf32>
    %13 = vector.broadcast %12 : vector<1x32xf32> to vector<16x32xf32>
    %14 = arith.addf %11, %13 : vector<16x32xf32>
    %cst_11 = arith.constant 0.000000e+00 : f32
    %15 = vector.broadcast %cst_11 : f32 to vector<16x32xf32>
    %16 = arith.maximumf %14, %15 : vector<16x32xf32>
    %17 = arith.truncf %16 : vector<16x32xf32> to vector<16x32xbf16>
    %c0_12 = arith.constant 0 : index
    %c0_13 = arith.constant 0 : index
    %18 = vector.load %arg6[%c0_12, %c0_13] : memref<32x4xbf16, #tpu.memory_space<vmem>>, vector<32x4xbf16>
    %cst_14 = arith.constant dense<0.000000e+00> : vector<16x4xf32>
    %19 = tpu.matmul %17, %18, %cst_14 {dimension_numbers = #tpu.dot_dimension_numbers<[1], [0], [0], [1], [0, 0, 1, 1], [], []>} : vector<16x32xbf16>, vector<32x4xbf16>, vector<16x4xf32> -> vector<16x4xf32>
    %c0_15 = arith.constant 0 : index
    %c0_16 = arith.constant 0 : index
    %20 = vector.load %arg7[%c0_15, %c0_16] : memref<1x4xf32, #tpu.memory_space<vmem>>, vector<1x4xf32>
    %21 = vector.broadcast %20 : vector<1x4xf32> to vector<16x4xf32>
    %22 = arith.addf %19, %21 : vector<16x4xf32>
    %c0_17 = arith.constant 0 : index
    %c0_18 = arith.constant 0 : index
    %23 = vector.load %arg8[%c0_17, %c0_18] : memref<16x4xf32, #tpu.memory_space<vmem>>, vector<16x4xf32>
    tpu.vector_store %arg8[%c0_17, %c0_18], %22 {strides = array<i32>} : memref<16x4xf32, #tpu.memory_space<vmem>>, vector<16x4xf32>,
    return
  }
  func.func @transform_0(%arg0: i32) -> (i32, i32) {
    %c0_i32 = arith.constant 0 : i32
    %c0_i32_0 = arith.constant 0 : i32
    return %arg0, %c0_i32 : i32, i32
  }
  func.func @transform_1(%arg0: i32) -> (i32, i32) {
    %c0_i32 = arith.constant 0 : i32
    %c0_i32_0 = arith.constant 0 : i32
    %c0_i32_1 = arith.constant 0 : i32
    return %c0_i32, %c0_i32_0 : i32, i32
  }
  func.func @transform_2(%arg0: i32) -> (i32, i32) {
    %c0_i32 = arith.constant 0 : i32
    %c0_i32_0 = arith.constant 0 : i32
    %c0_i32_1 = arith.constant 0 : i32
    return %c0_i32, %c0_i32_0 : i32, i32
  }
  func.func @transform_3(%arg0: i32) -> (i32, i32) {
    %c0_i32 = arith.constant 0 : i32
    %c0_i32_0 = arith.constant 0 : i32
    %c0_i32_1 = arith.constant 0 : i32
    return %c0_i32, %c0_i32_0 : i32, i32
  }
  func.func @transform_4(%arg0: i32) -> (i32, i32) {
    %c0_i32 = arith.constant 0 : i32
    %c0_i32_0 = arith.constant 0 : i32
    %c0_i32_1 = arith.constant 0 : i32
    return %c0_i32, %c0_i32_0 : i32, i32
  }
  func.func @transform_5(%arg0: i32) -> (i32, i32) {
    %c0_i32 = arith.constant 0 : i32
    %c0_i32_0 = arith.constant 0 : i32
    %c0_i32_1 = arith.constant 0 : i32
    return %c0_i32, %c0_i32_0 : i32, i32
  }
  func.func @transform_6(%arg0: i32) -> (i32, i32) {
    %c0_i32 = arith.constant 0 : i32
    %c0_i32_0 = arith.constant 0 : i32
    %c0_i32_1 = arith.constant 0 : i32
    return %c0_i32, %c0_i32_0 : i32, i32
  }
  func.func @transform_7(%arg0: i32) -> (i32, i32) {
    %c0_i32 = arith.constant 0 : i32
    %c0_i32_0 = arith.constant 0 : i32
    return %arg0, %c0_i32 : i32, i32
  }
}

</mosaic_0001>

<llo_original>
// kernel: tpu_custom_call.1
$region0: #{tpu_custom_call.1}
  #allocation0 [shape = 'u32[]', space=smem, size = 0x4, offset = 0x4, fixed_abs, tag = 'smem constant byte address 0x4 - core index']
  #allocation1 [shape = 'u32[72,128]{1,0:T(1,128)}', space=vmem, size = 0x9000, scoped, tag = 'internal scratch']
  %s0 = inlined_call_operand.vmem [shape: f32[16,16], index: 0, kind: input, shape index: {}]
  %s1 = inlined_call_operand.hbm [shape: bf16[16,32], index: 1, kind: input, shape index: {}]
  %s2 = inlined_call_operand.vmem [shape: f32[1,32], index: 2, kind: input, shape index: {}]
  %s3 = inlined_call_operand.hbm [shape: bf16[32,32], index: 3, kind: input, shape index: {}]
  %s4 = inlined_call_operand.vmem [shape: f32[1,32], index: 4, kind: input, shape index: {}]
  %s5 = inlined_call_operand.vmem [shape: bf16[32,4], index: 5, kind: input, shape index: {}]
  %s6 = inlined_call_operand.vmem [shape: f32[1,4], index: 6, kind: input, shape index: {}]
  %s7 = inlined_call_operand.vmem [shape: f32[16,4], index: 7, kind: output, shape index: {}]
  %s8 = sld [smem:[#allocation0]]
  $region46: #{tpu_custom_call.1} parent=0
    _
  %s10 = ssub.s32 1, %s8
  %s11 = scalar_select 0, %s10, %s8
  $region1: #{tpu_custom_call.1} parent=0
    #allocation2 [shape = 'u8[4096]{0}', space=vmem, size = 0x1000, scoped, tag = 'input window, operand 1, single buffered']
    #allocation3 [shape = 's32[1]{0}', space=sflag, size = 0x4, scoped, tag = 'scoped memory for tpu_custom_call.1']
    #allocation4 [shape = 'u8[8192]{0}', space=vmem, size = 0x2000, scoped, tag = 'input window, operand 3, single buffered']
    #allocation5 [shape = 's32[1]{0}', space=sflag, size = 0x4, scoped, tag = 'scoped memory for tpu_custom_call.1']
    %12 = vsyncpa [#allocation3], 0
    %13 = vsyncpa [#allocation5], 0
    // Predicated region
    $region2: #{tpu_custom_call.1} parent=1 // pred_check
      _
    $region3: #{tpu_custom_call.1} parent=1 // pred_check_branch
      %15 = sbr.rel (0) target = $region5
    $region4: #{tpu_custom_call.1} parent=1 // pred_region
      _
    $region5: #{tpu_custom_call.1} parent=1 // pred_fallthru
      _
    // Predicated region
    $region6: #{tpu_custom_call.1} parent=1 // pred_check
      _
    $region7: #{tpu_custom_call.1} parent=1 // pred_check_branch
      %17 = sbr.rel (0) target = $region9
    $region8: #{tpu_custom_call.1} parent=1 // pred_region
      %19 = vsyncadd [#allocation3], 0
      %s20 = sshll.u32 %s1, 4
      %s21 = int_to_ptr.hbm [resolvable:$true] %s20
      %s22 = sshll.u32 [#allocation2], 4
      %s23 = int_to_ptr.vmem [resolvable:$true] %s22
      %28 = dma.hbm_to_vmem [thread:$0]  %s21, 128, %s23, [#allocation3], 64, 64, 4
    $region9: #{tpu_custom_call.1} parent=1 // pred_fallthru
      _
    // Predicated region
    $region10: #{tpu_custom_call.1} parent=1 // pred_check
      _
    $region11: #{tpu_custom_call.1} parent=1 // pred_check_branch
      %30 = sbr.rel (0) target = $region13
    $region12: #{tpu_custom_call.1} parent=1 // pred_region
      _
    $region13: #{tpu_custom_call.1} parent=1 // pred_fallthru
      _
    // Predicated region
    $region14: #{tpu_custom_call.1} parent=1 // pred_check
      _
    $region15: #{tpu_custom_call.1} parent=1 // pred_check_branch
      %32 = sbr.rel (0) target = $region17
    $region16: #{tpu_custom_call.1} parent=1 // pred_region
      %34 = vsyncadd [#allocation5], 0
      %s35 = sshll.u32 %s3, 4
      %s36 = int_to_ptr.hbm [resolvable:$true] %s35
      %s37 = sshll.u32 [#allocation4], 4
      %s38 = int_to_ptr.vmem [resolvable:$true] %s37
      %43 = dma.hbm_to_vmem [thread:$0]  %s36, 256, %s38, [#allocation5], 64, 64, 4
    $region17: #{tpu_custom_call.1} parent=1 // pred_fallthru
      _
    // Predicated region
    $region18: #{tpu_custom_call.1} parent=1 // pred_check
      _
    $region19: #{tpu_custom_call.1} parent=1 // pred_check_branch
      %45 = sbr.rel (0) target = $region21
    $region20: #{tpu_custom_call.1} parent=1 // pred_region
      _
    $region21: #{tpu_custom_call.1} parent=1 // pred_fallthru
      _
    // Predicated region
    $region22: #{tpu_custom_call.1} parent=1 // pred_check
      _
    $region23: #{tpu_custom_call.1} parent=1 // pred_check_branch
      %47 = sbr.rel (0) target = $region25
    $region24: #{tpu_custom_call.1} parent=1 // pred_region
      _
    $region25: #{tpu_custom_call.1} parent=1 // pred_fallthru
      _
    // Predicated region
    $region26: #{tpu_custom_call.1} parent=1 // pred_check
      _
    $region27: #{tpu_custom_call.1} parent=1 // pred_check_branch
      %49 = sbr.rel (0) target = $region29
    $region28: #{tpu_custom_call.1} parent=1 // pred_region
      _
    $region29: #{tpu_custom_call.1} parent=1 // pred_fallthru
      _
    // Predicated region
    $region30: #{tpu_custom_call.1} parent=1 // pred_check
      _
    $region31: #{tpu_custom_call.1} parent=1 // pred_check_branch
      %51 = sbr.rel (0) target = $region33
    $region32: #{tpu_custom_call.1} parent=1 // pred_region
      %53 = dma.done [#allocation3], 128
    $region33: #{tpu_custom_call.1} parent=1 // pred_fallthru
      _
    // Predicated region
    $region34: #{tpu_custom_call.1} parent=1 // pred_check
      _
    $region35: #{tpu_custom_call.1} parent=1 // pred_check_branch
      %55 = sbr.rel (0) target = $region37
    $region36: #{tpu_custom_call.1} parent=1 // pred_region
      %57 = dma.done [#allocation5], 256
    $region37: #{tpu_custom_call.1} parent=1 // pred_fallthru
      _
    %v59 = vld [vmem:[%s0] sm:$0xff]
    %v60 = vld [vmem:[%s0 + $0x8] sm:$0xff]
    %v61 = vpack.c.bf16 %v60, %v59
    %v62 = vld [vmem:[#allocation2] sm:$0xf]
    %v63 = vld [vmem:[#allocation2 + $0x4] sm:$0xf]
    %v64 = vld [vmem:[%s2] sm:$0x1]
    %v66 = vperm.slane %v64, 0
    %v70 = vunpack.c.l.b16 %v62
    %v71 = vunpack.c.l.b16 %v63
    %v72 = vpack.c.b16 %v71, %v70
    %vm74 = vcmask 130048
    %v76 = vsel %vm74, %v61, 0
    %78 = vmatpush.bf16.msra.mxu0 0
    %79 = vmatpush.bf16.msra.mxu0 0
    %80 = vmatpush.bf16.msra.mxu0 0
    %81 = vmatpush.bf16.msra.mxu0 0
    %82 = vmatpush.bf16.msra.mxu0 0
    %83 = vmatpush.bf16.msra.mxu0 0
    %84 = vmatpush.bf16.msra.mxu0 0
    %85 = vmatpush.bf16.msra.mxu0 %v72
    %86 = vmatmul.bf16.gmra.mxu0 %v76
    %v87 = vpop.f32.mrf.mxu0
    %v88 = vadd.f32 %v66, %v87
    %v89 = vpop.f32.mrf.mxu0
    %v90 = vadd.f32 %v66, %v89
    %91 = vdwg.mxu0
    %v92 = vmax.f32 %v88, 0.0
    %v93 = vmax.f32 %v90, 0.0
    %v94 = vpack.c.bf16 %v93, %v92
    %v95 = vld [vmem:[#allocation4] sm:$0xf]
    %v96 = vld [vmem:[#allocation4 + $0x4] sm:$0xf]
    %v97 = vld [vmem:[#allocation4 + $0x8] sm:$0xf]
    %v98 = vld [vmem:[#allocation4 + $0xc] sm:$0xf]
    %v99 = vld [vmem:[%s4] sm:$0x1]
    %v101 = vperm.slane %v99, 0
    %v107 = vunpack.c.l.b16 %v95
    %v108 = vunpack.c.l.b16 %v96
    %v109 = vunpack.c.l.b16 %v97
    %v110 = vunpack.c.l.b16 %v98
    %v111 = vpack.c.b16 %v108, %v107
    %v112 = vpack.c.b16 %v110, %v109
    %vm115 = vcmask 261120
    %v117 = vsel %vm115, %v94, 0
    %119 = vmatpush.bf16.msra.mxu0 0
    %120 = vmatpush.bf16.msra.mxu0 0
    %121 = vmatpush.bf16.msra.mxu0 0
    %122 = vmatpush.bf16.msra.mxu0 0
    %123 = vmatpush.bf16.msra.mxu0 0
    %124 = vmatpush.bf16.msra.mxu0 0
    %125 = vmatpush.bf16.msra.mxu0 %v112
    %126 = vmatpush.bf16.msra.mxu0 %v111
    %127 = vmatmul.bf16.gmra.mxu0 %v117
    %v128 = vpop.f32.mrf.mxu0
    %v129 = vadd.f32 %v101, %v128
    %v130 = vpop.f32.mrf.mxu0
    %v131 = vadd.f32 %v101, %v130
    %132 = vdwg.mxu0
    %v133 = vmax.f32 %v129, 0.0
    %v134 = vmax.f32 %v131, 0.0
    %v135 = vpack.c.bf16 %v134, %v133
    %v136 = vld [vmem:[%s5] sm:$0xf]
    %v137 = vld [vmem:[%s5 + $0x4] sm:$0xf]
    %v138 = vld [vmem:[%s5 + $0x8] sm:$0xf]
    %v139 = vld [vmem:[%s5 + $0xc] sm:$0xf]
    %v140 = vld [vmem:[%s6] sm:$0x1]
    %v142 = vperm.slane %v140, 0
    %v148 = vunpack.c.l.b16 %v136
    %v149 = vunpack.c.l.b16 %v137
    %v150 = vunpack.c.l.b16 %v138
    %v151 = vunpack.c.l.b16 %v139
    %v152 = vpack.c.b16 %v149, %v148
    %v153 = vpack.c.b16 %v151, %v150
    %v157 = vsel %vm115, %v135, 0
    %159 = vmatpush.bf16.msra.mxu0 0
    %160 = vmatpush.bf16.msra.mxu0 0
    %161 = vmatpush.bf16.msra.mxu0 0
    %162 = vmatpush.bf16.msra.mxu0 0
    %163 = vmatpush.bf16.msra.mxu0 0
    %164 = vmatpush.bf16.msra.mxu0 0
    %165 = vmatpush.bf16.msra.mxu0 %v153
    %166 = vmatpush.bf16.msra.mxu0 %v152
    %167 = vmatmul.bf16.gmra.mxu0 %v157
    %v168 = vpop.f32.mrf.mxu0
    %v169 = vadd.f32 %v142, %v168
    %v170 = vpop.f32.mrf.mxu0
    %v171 = vadd.f32 %v142, %v170
    %172 = vdwg.mxu0
    %vm173 = vcmask 31744
    %174 = vst.msk [vmem:[%s7] sm:$0xff] %vm173, %v169
    %175 = vst.msk [vmem:[%s7 + $0x8] sm:$0xff] %vm173, %v171
    // Predicated region
    $region38: #{tpu_custom_call.1} parent=1 // pred_check
      _
    $region39: #{tpu_custom_call.1} parent=1 // pred_check_branch
      %177 = sbr.rel (0) target = $region41
    $region40: #{tpu_custom_call.1} parent=1 // pred_region
      _
    $region41: #{tpu_custom_call.1} parent=1 // pred_fallthru
      _
    // Predicated region
    $region42: #{tpu_custom_call.1} parent=1 // pred_check
      _
    $region43: #{tpu_custom_call.1} parent=1 // pred_check_branch
      %179 = sbr.rel (0) target = $region45
    $region44: #{tpu_custom_call.1} parent=1 // pred_region
      _
    $region45: #{tpu_custom_call.1} parent=1 // pred_fallthru
      _
    %180 = vsyncpa [#allocation3], 1
    %181 = vsyncpa [#allocation5], 1

// kernel: tpu_custom_call.1
$region0: #{tpu_custom_call.1}
  #allocation0 [shape = 'u32[]', space=smem, size = 0x4, offset = 0x4, fixed_abs, tag = 'smem constant byte address 0x4 - core index']
  #allocation1 [shape = 'u32[72,128]{1,0:T(1,128)}', space=vmem, size = 0x9000, scoped, tag = 'internal scratch']
  %s0 = inlined_call_operand.vmem [shape: f32[16,16], index: 0, kind: input, shape index: {}]
  %s1 = inlined_call_operand.hbm [shape: bf16[16,32], index: 1, kind: input, shape index: {}]
  %s2 = inlined_call_operand.vmem [shape: f32[1,32], index: 2, kind: input, shape index: {}]
  %s3 = inlined_call_operand.hbm [shape: bf16[32,32], index: 3, kind: input, shape index: {}]
  %s4 = inlined_call_operand.vmem [shape: f32[1,32], index: 4, kind: input, shape index: {}]
  %s5 = inlined_call_operand.vmem [shape: bf16[32,4], index: 5, kind: input, shape index: {}]
  %s6 = inlined_call_operand.vmem [shape: f32[1,4], index: 6, kind: input, shape index: {}]
  %s7 = inlined_call_operand.vmem [shape: f32[16,4], index: 7, kind: output, shape index: {}]
  %s8 = sld [smem:[#allocation0]]
  $region46: #{tpu_custom_call.1} parent=0
    _
  %s10 = ssub.s32 1, %s8
  %s11 = scalar_select 0, %s10, %s8
  $region1: #{tpu_custom_call.1} parent=0
    #allocation2 [shape = 'u8[4096]{0}', space=vmem, size = 0x1000, scoped, tag = 'input window, operand 1, single buffered']
    #allocation3 [shape = 's32[1]{0}', space=sflag, size = 0x4, scoped, tag = 'scoped memory for tpu_custom_call.1']
    #allocation4 [shape = 'u8[8192]{0}', space=vmem, size = 0x2000, scoped, tag = 'input window, operand 3, single buffered']
    #allocation5 [shape = 's32[1]{0}', space=sflag, size = 0x4, scoped, tag = 'scoped memory for tpu_custom_call.1']
    %12 = vsyncpa [#allocation3], 0
    %13 = vsyncpa [#allocation5], 0
    // Predicated region
    $region2: #{tpu_custom_call.1} parent=1 // pred_check
      _
    $region3: #{tpu_custom_call.1} parent=1 // pred_check_branch
      %15 = sbr.rel (0) target = $region5
    $region4: #{tpu_custom_call.1} parent=1 // pred_region
      _
    $region5: #{tpu_custom_call.1} parent=1 // pred_fallthru
      _
    // Predicated region
    $region6: #{tpu_custom_call.1} parent=1 // pred_check
      _
    $region7: #{tpu_custom_call.1} parent=1 // pred_check_branch
      %17 = sbr.rel (0) target = $region9
    $region8: #{tpu_custom_call.1} parent=1 // pred_region
      %19 = vsyncadd [#allocation3], 0
      %s20 = sshll.u32 %s1, 4
      %s21 = int_to_ptr.hbm [resolvable:$true] %s20
      %s22 = sshll.u32 [#allocation2], 4
      %s23 = int_to_ptr.vmem [resolvable:$true] %s22
      %28 = dma.hbm_to_vmem [thread:$0]  %s21, 128, %s23, [#allocation3], 64, 64, 4
    $region9: #{tpu_custom_call.1} parent=1 // pred_fallthru
      _
    // Predicated region
    $region10: #{tpu_custom_call.1} parent=1 // pred_check
      _
    $region11: #{tpu_custom_call.1} parent=1 // pred_check_branch
      %30 = sbr.rel (0) target = $region13
    $region12: #{tpu_custom_call.1} parent=1 // pred_region
      _
    $region13: #{tpu_custom_call.1} parent=1 // pred_fallthru
      _
    // Predicated region
    $region14: #{tpu_custom_call.1} parent=1 // pred_check
      _
    $region15: #{tpu_custom_call.1} parent=1 // pred_check_branch
      %32 = sbr.rel (0) target = $region17
    $region16: #{tpu_custom_call.1} parent=1 // pred_region
      %34 = vsyncadd [#allocation5], 0
      %s35 = sshll.u32 %s3, 4
      %s36 = int_to_ptr.hbm [resolvable:$true] %s35
      %s37 = sshll.u32 [#allocation4], 4
      %s38 = int_to_ptr.vmem [resolvable:$true] %s37
      %43 = dma.hbm_to_vmem [thread:$0]  %s36, 256, %s38, [#allocation5], 64, 64, 4
    $region17: #{tpu_custom_call.1} parent=1 // pred_fallthru
      _
    // Predicated region
    $region18: #{tpu_custom_call.1} parent=1 // pred_check
      _
    $region19: #{tpu_custom_call.1} parent=1 // pred_check_branch
      %45 = sbr.rel (0) target = $region21
    $region20: #{tpu_custom_call.1} parent=1 // pred_region
      _
    $region21: #{tpu_custom_call.1} parent=1 // pred_fallthru
      _
    // Predicated region
    $region22: #{tpu_custom_call.1} parent=1 // pred_check
      _
    $region23: #{tpu_custom_call.1} parent=1 // pred_check_branch
      %47 = sbr.rel (0) target = $region25
    $region24: #{tpu_custom_call.1} parent=1 // pred_region
      _
    $region25: #{tpu_custom_call.1} parent=1 // pred_fallthru
      _
    // Predicated region
    $region26: #{tpu_custom_call.1} parent=1 // pred_check
      _
    $region27: #{tpu_custom_call.1} parent=1 // pred_check_branch
      %49 = sbr.rel (0) target = $region29
    $region28: #{tpu_custom_call.1} parent=1 // pred_region
      _
    $region29: #{tpu_custom_call.1} parent=1 // pred_fallthru
      _
    // Predicated region
    $region30: #{tpu_custom_call.1} parent=1 // pred_check
      _
    $region31: #{tpu_custom_call.1} parent=1 // pred_check_branch
      %51 = sbr.rel (0) target = $region33
    $region32: #{tpu_custom_call.1} parent=1 // pred_region
      %53 = dma.done [#allocation3], 128
    $region33: #{tpu_custom_call.1} parent=1 // pred_fallthru
      _
    // Predicated region
    $region34: #{tpu_custom_call.1} parent=1 // pred_check
      _
    $region35: #{tpu_custom_call.1} parent=1 // pred_check_branch
      %55 = sbr.rel (0) target = $region37
    $region36: #{tpu_custom_call.1} parent=1 // pred_region
      %57 = dma.done [#allocation5], 256
    $region37: #{tpu_custom_call.1} parent=1 // pred_fallthru
      _
    %v59 = vld [vmem:[%s0] sm:$0xff]
    %v60 = vld [vmem:[%s0 + $0x8] sm:$0xff]
    %v61 = vpack.c.bf16 %v60, %v59
    %v62 = vld [vmem:[#allocation2] sm:$0xf]
    %v63 = vld [vmem:[#allocation2 + $0x4] sm:$0xf]
    %v64 = vld [vmem:[%s2] sm:$0x1]
    %v66 = vperm.slane %v64, 0
    %v70 = vunpack.c.l.b16 %v62
    %v71 = vunpack.c.l.b16 %v63
    %v72 = vpack.c.b16 %v71, %v70
    %vm74 = vcmask 130048
    %v76 = vsel %vm74, %v61, 0
    %78 = vmatpush.bf16.msra.mxu0 0
    %79 = vmatpush.bf16.msra.mxu0 0
    %80 = vmatpush.bf16.msra.mxu0 0
    %81 = vmatpush.bf16.msra.mxu0 0
    %82 = vmatpush.bf16.msra.mxu0 0
    %83 = vmatpush.bf16.msra.mxu0 0
    %84 = vmatpush.bf16.msra.mxu0 0
    %85 = vmatpush.bf16.msra.mxu0 %v72
    %86 = vmatmul.bf16.gmra.mxu0 %v76
    %v87 = vpop.f32.mrf.mxu0
    %v88 = vadd.f32 %v66, %v87
    %v89 = vpop.f32.mrf.mxu0
    %v90 = vadd.f32 %v66, %v89
    %91 = vdwg.mxu0
    %v92 = vmax.f32 %v88, 0.0
    %v93 = vmax.f32 %v90, 0.0
    %v94 = vpack.c.bf16 %v93, %v92
    %v95 = vld [vmem:[#allocation4] sm:$0xf]
    %v96 = vld [vmem:[#allocation4 + $0x4] sm:$0xf]
    %v97 = vld [vmem:[#allocation4 + $0x8] sm:$0xf]
    %v98 = vld [vmem:[#allocation4 + $0xc] sm:$0xf]
    %v99 = vld [vmem:[%s4] sm:$0x1]
    %v101 = vperm.slane %v99, 0
    %v107 = vunpack.c.l.b16 %v95
    %v108 = vunpack.c.l.b16 %v96
    %v109 = vunpack.c.l.b16 %v97
    %v110 = vunpack.c.l.b16 %v98
    %v111 = vpack.c.b16 %v108, %v107
    %v112 = vpack.c.b16 %v110, %v109
    %vm115 = vcmask 261120
    %v117 = vsel %vm115, %v94, 0
    %119 = vmatpush.bf16.msra.mxu0 0
    %120 = vmatpush.bf16.msra.mxu0 0
    %121 = vmatpush.bf16.msra.mxu0 0
    %122 = vmatpush.bf16.msra.mxu0 0
    %123 = vmatpush.bf16.msra.mxu0 0
    %124 = vmatpush.bf16.msra.mxu0 0
    %125 = vmatpush.bf16.msra.mxu0 %v112
    %126 = vmatpush.bf16.msra.mxu0 %v111
    %127 = vmatmul.bf16.gmra.mxu0 %v117
    %v128 = vpop.f32.mrf.mxu0
    %v129 = vadd.f32 %v101, %v128
    %v130 = vpop.f32.mrf.mxu0
    %v131 = vadd.f32 %v101, %v130
    %132 = vdwg.mxu0
    %v133 = vmax.f32 %v129, 0.0
    %v134 = vmax.f32 %v131, 0.0
    %v135 = vpack.c.bf16 %v134, %v133
    %v136 = vld [vmem:[%s5] sm:$0xf]
    %v137 = vld [vmem:[%s5 + $0x4] sm:$0xf]
    %v138 = vld [vmem:[%s5 + $0x8] sm:$0xf]
    %v139 = vld [vmem:[%s5 + $0xc] sm:$0xf]
    %v140 = vld [vmem:[%s6] sm:$0x1]
    %v142 = vperm.slane %v140, 0
    %v148 = vunpack.c.l.b16 %v136
    %v149 = vunpack.c.l.b16 %v137
    %v150 = vunpack.c.l.b16 %v138
    %v151 = vunpack.c.l.b16 %v139
    %v152 = vpack.c.b16 %v149, %v148
    %v153 = vpack.c.b16 %v151, %v150
    %v157 = vsel %vm115, %v135, 0
    %159 = vmatpush.bf16.msra.mxu0 0
    %160 = vmatpush.bf16.msra.mxu0 0
    %161 = vmatpush.bf16.msra.mxu0 0
    %162 = vmatpush.bf16.msra.mxu0 0
    %163 = vmatpush.bf16.msra.mxu0 0
    %164 = vmatpush.bf16.msra.mxu0 0
    %165 = vmatpush.bf16.msra.mxu0 %v153
    %166 = vmatpush.bf16.msra.mxu0 %v152
    %167 = vmatmul.bf16.gmra.mxu0 %v157
    %v168 = vpop.f32.mrf.mxu0
    %v169 = vadd.f32 %v142, %v168
    %v170 = vpop.f32.mrf.mxu0
    %v171 = vadd.f32 %v142, %v170
    %172 = vdwg.mxu0
    %vm173 = vcmask 31744
    %174 = vst.msk [vmem:[%s7] sm:$0xff] %vm173, %v169
    %175 = vst.msk [vmem:[%s7 + $0x8] sm:$0xff] %vm173, %v171
    // Predicated region
    $region38: #{tpu_custom_call.1} parent=1 // pred_check
      _
    $region39: #{tpu_custom_call.1} parent=1 // pred_check_branch
      %177 = sbr.rel (0) target = $region41
    $region40: #{tpu_custom_call.1} parent=1 // pred_region
      _
    $region41: #{tpu_custom_call.1} parent=1 // pred_fallthru
      _
    // Predicated region
    $region42: #{tpu_custom_call.1} parent=1 // pred_check
      _
    $region43: #{tpu_custom_call.1} parent=1 // pred_check_branch
      %179 = sbr.rel (0) target = $region45
    $region44: #{tpu_custom_call.1} parent=1 // pred_region
      _
    $region45: #{tpu_custom_call.1} parent=1 // pred_fallthru
      _
    %180 = vsyncpa [#allocation3], 1
    %181 = vsyncpa [#allocation5], 1

</llo_original>
